<compile_context>
chip_gen: v7x
topology: tpu7x:2x2x1
jax: 0.10.0
libtpu: 0.0.40
codegen_flags: <defaults>
</compile_context>

<pallas_src>
import jax
import jax.numpy as jnp
from jax.experimental import pallas as pl
from jax.experimental.pallas import tpu as pltpu


def _additive_attn_kernel(qk_ref, k_ref, mask_ref, wcat_ref, wv_ref,
                          attn_ref, ctx_ref):
    TB, S, Dqk = qk_ref.shape

    # Fused projection: tanh(q @ Wq + k @ Wk) == tanh([q|k] @ [Wq; Wk]).
    # Fold (TB, S) into the matmul M dimension so the MXU sees TB*S rows.
    qk = qk_ref[...].reshape(TB * S, Dqk)
    feats = jnp.tanh(jnp.dot(qk, wcat_ref[...],
                             preferred_element_type=jnp.float32))       # (TB*S, H)
    feats = feats.reshape(TB, S, -1)                                    # (TB, S, H)

    # scores = w_v(features): width-1 matmul -> VPU multiply + lane reduce.
    scores = jnp.sum(feats * wv_ref[...], axis=-1)                      # (TB, S)

    # scores[pad_mask] = -inf. Use a large finite negative so a fully padded
    # row cannot produce NaN; exp() still underflows to exactly 0 for masked
    # positions.
    scores = jnp.where(mask_ref[...] != 0, jnp.float32(-1e30), scores)

    # softmax over the sequence (lane) axis.
    m = jnp.max(scores, axis=-1, keepdims=True)                         # (TB, 1)
    e = jnp.exp(scores - m)
    denom = jnp.sum(e, axis=-1, keepdims=True)
    attn = e * pl.reciprocal(denom, approx=True)                        # (TB, S)
    attn_ref[...] = attn.astype(attn_ref.dtype)

    # context = keys^T @ attn_weights, done as VPU multiply + sublane reduce
    # over S (avoids transposing keys and another N=1 MXU matmul).
    # Dropout(p=0.0) is the identity.
    ctx = jnp.sum(k_ref[...] * attn[:, :, None], axis=1)                # (TB, Dk)
    ctx_ref[...] = ctx.astype(ctx_ref.dtype)


def _choose_tb(batch, seq):
    """Batch tile: prefer a multiple of 8 (sublane-legal block) that divides
    the batch and gives ~512 matmul rows per grid step; otherwise fall back to
    the whole batch (block dims == full array dims are always legal)."""
    target_rows = 512
    cap = min(batch, max(1, target_rows // max(seq, 1)))
    best = 0
    tb = 8
    while tb <= cap:
        if batch % tb == 0:
            best = tb
        tb += 8
    return best if best > 0 else batch


def additive_attention(queries, keys, pad_mask, wq, wk, wv, *, tb=None,
                       matmul_dtype=jnp.float32):
    """queries:(B,S,Dq) keys:(B,S,Dk) pad_mask:(B,S,1) (bool/int, nonzero==pad)
       wq:(Dq,H) wk:(Dk,H) wv:(H,1)  ->  (attn (B,S,1), context (B,Dk,1))

    matmul_dtype=jnp.bfloat16 halves matmul-input DMA bytes and reaches full
    MXU rate on v6e/v7x (accumulation stays f32); default f32 preserves the
    PyTorch module's numerics."""
    B, S, Dq = queries.shape
    Dk = keys.shape[2]
    H = wq.shape[1]
    Dqk = Dq + Dk

    # Fuse the two projections into one matmul operand / one weight.
    qk = jnp.concatenate([queries, keys], axis=-1).astype(matmul_dtype)  # (B,S,Dq+Dk)
    w_cat = jnp.concatenate([wq, wk], axis=0).astype(matmul_dtype)       # (Dq+Dk,H)
    wv_row = wv.reshape(1, H).astype(jnp.float32)                        # lane-dense
    mask2d = pad_mask.reshape(B, S).astype(jnp.int32)                    # lane-dense

    if tb is None:
        tb = _choose_tb(B, S)
    assert B % tb == 0, (B, tb)
    grid = (B // tb,)

    attn2d, ctx2d = pl.pallas_call(
        _additive_attn_kernel,
        out_shape=(jax.ShapeDtypeStruct((B, S), jnp.float32),
                   jax.ShapeDtypeStruct((B, Dk), jnp.float32)),
        grid_spec=pltpu.PrefetchScalarGridSpec(
            num_scalar_prefetch=0,
            grid=grid,
            in_specs=[
                pl.BlockSpec((tb, S, Dqk), lambda b: (b, 0, 0)),   # [q|k]
                pl.BlockSpec((tb, S, Dk), lambda b: (b, 0, 0)),    # keys
                pl.BlockSpec((tb, S), lambda b: (b, 0)),           # mask
                pl.BlockSpec((Dqk, H), lambda b: (0, 0)),          # [Wq;Wk]
                pl.BlockSpec((1, H), lambda b: (0, 0)),            # w_v row
            ],
            out_specs=(
                pl.BlockSpec((tb, S), lambda b: (b, 0)),           # attn (lane-dense)
                pl.BlockSpec((tb, Dk), lambda b: (b, 0)),          # context (lane-dense)
            ),
        ),
        compiler_params=pltpu.CompilerParams(
            dimension_semantics=("parallel",)),                    # megacore-friendly
    )(qk, keys, mask2d, w_cat, wv_row)

    # Back to the PyTorch module's output shapes (metadata-only reshapes).
    return attn2d[:, :, None], ctx2d[:, :, None]


def _reference(queries, keys, pad_mask, wq, wk, wv):
    tq = queries @ wq
    tk = keys @ wk
    feats = jnp.tanh(tq + tk)
    scores = feats @ wv
    scores = jnp.where(pad_mask != 0, -jnp.inf, scores)
    attn = jax.nn.softmax(scores, axis=1)
    ctx = jnp.einsum("bsk,bso->bko", keys, attn)
    return attn, ctx


if __name__ == "__main__":
    B, S = 2, 8
    query_size, key_size, hidden_size = 16, 24, 32

    key = jax.random.PRNGKey(0)
    k1, k2, k3, k4, k5 = jax.random.split(key, 5)

    queries = jax.random.normal(k1, (B, S, query_size), dtype=jnp.float32)
    keys = jax.random.normal(k2, (B, S, key_size), dtype=jnp.float32)
    # mask a couple of trailing positions per batch (nonzero == padded)
    pad_mask = (jnp.arange(S)[None, :, None] >= jnp.array([6, 7])[:, None, None]
                ).astype(jnp.int32)                       # (B, S, 1)

    # Deterministic "nn.Linear"-style init (uniform +-1/sqrt(fan_in)), stored
    # pre-transposed as (in, out).
    wq = jax.random.uniform(k3, (query_size, hidden_size), jnp.float32,
                            -1.0 / query_size ** 0.5, 1.0 / query_size ** 0.5)
    wk = jax.random.uniform(k4, (key_size, hidden_size), jnp.float32,
                            -1.0 / key_size ** 0.5, 1.0 / key_size ** 0.5)
    wv = jax.random.uniform(k5, (hidden_size, 1), jnp.float32,
                            -1.0 / hidden_size ** 0.5, 1.0 / hidden_size ** 0.5)

    attn, ctx = additive_attention(queries, keys, pad_mask, wq, wk, wv)
    jax.block_until_ready((attn, ctx))

    attn_ref, ctx_ref = _reference(queries, keys, pad_mask, wq, wk, wv)
    # Tolerance accounts for the EUP approximate reciprocal in the softmax.
    assert jnp.allclose(attn, attn_ref, atol=1e-3, rtol=1e-3), \
        float(jnp.max(jnp.abs(attn - attn_ref)))
    assert jnp.allclose(ctx, ctx_ref, atol=1e-3, rtol=1e-3), \
        float(jnp.max(jnp.abs(ctx - ctx_ref)))

    print("KERNEL_OK")
</pallas_src>

<mosaic_0001>
module attributes {stable_mosaic.version = 11 : i64} {
  func.func @_additive_attn_kernel(%arg0: i32, %arg1: memref<2x8x40xf32, #tpu.memory_space<vmem>>, %arg2: memref<2x8x24xf32, #tpu.memory_space<vmem>>, %arg3: memref<2x8xi32, #tpu.memory_space<vmem>>, %arg4: memref<40x32xf32, #tpu.memory_space<vmem>>, %arg5: memref<1x32xf32, #tpu.memory_space<vmem>>, %arg6: memref<2x8xf32, #tpu.memory_space<vmem>>, %arg7: memref<2x24xf32, #tpu.memory_space<vmem>>) attributes {dimension_semantics = [#tpu.dimension_semantics<parallel>], iteration_bounds = array<i64: 1>, scalar_prefetch = 0 : i64, scratch_operands = 0 : i64, tpu.core_type = #tpu.core_type<tc>, window_params = [{transform_indices = @transform_0, window_bounds = array<i64: 2, 8, 40>}, {transform_indices = @transform_1, window_bounds = array<i64: 2, 8, 24>}, {transform_indices = @transform_2, window_bounds = array<i64: 2, 8>}, {pipeline_mode = #tpu.pipeline_mode<synchronous>, transform_indices = @transform_3, window_bounds = array<i64: 40, 32>}, {pipeline_mode = #tpu.pipeline_mode<synchronous>, transform_indices = @transform_4, window_bounds = array<i64: 1, 32>}, {transform_indices = @transform_5, window_bounds = array<i64: 2, 8>}, {transform_indices = @transform_6, window_bounds = array<i64: 2, 24>}]} {
    %c0 = arith.constant 0 : index
    %c0_0 = arith.constant 0 : index
    %c0_1 = arith.constant 0 : index
    %0 = vector.load %arg1[%c0, %c0_0, %c0_1] : memref<2x8x40xf32, #tpu.memory_space<vmem>>, vector<2x8x40xf32>
    %1 = vector.shape_cast %0 : vector<2x8x40xf32> to vector<16x40xf32>
    %c0_2 = arith.constant 0 : index
    %c0_3 = arith.constant 0 : index
    %2 = vector.load %arg4[%c0_2, %c0_3] : memref<40x32xf32, #tpu.memory_space<vmem>>, vector<40x32xf32>
    %cst = arith.constant dense<0.000000e+00> : vector<16x32xf32>
    %3 = tpu.matmul %1, %2, %cst {dimension_numbers = #tpu.dot_dimension_numbers<[1], [0], [0], [1], [0, 0, 1, 1], [], []>} : vector<16x40xf32>, vector<40x32xf32>, vector<16x32xf32> -> vector<16x32xf32>
    %4 = math.tanh %3 : vector<16x32xf32>
    %5 = vector.shape_cast %4 : vector<16x32xf32> to vector<2x8x32xf32>
    %c0_4 = arith.constant 0 : index
    %c0_5 = arith.constant 0 : index
    %6 = vector.load %arg5[%c0_4, %c0_5] : memref<1x32xf32, #tpu.memory_space<vmem>>, vector<1x32xf32>
    %7 = vector.shape_cast %6 : vector<1x32xf32> to vector<1x1x32xf32>
    %8 = vector.broadcast %7 : vector<1x1x32xf32> to vector<2x8x32xf32>
    %9 = arith.mulf %5, %8 : vector<2x8x32xf32>
    %cst_6 = arith.constant dense<0.000000e+00> : vector<2x8xf32>
    %10 = vector.multi_reduction <add>, %9, %cst_6 [2] : vector<2x8x32xf32> to vector<2x8xf32>
    %c0_7 = arith.constant 0 : index
    %c0_8 = arith.constant 0 : index
    %11 = vector.load %arg3[%c0_7, %c0_8] : memref<2x8xi32, #tpu.memory_space<vmem>>, vector<2x8xi32>
    %c0_i32 = arith.constant 0 : i32
    %12 = vector.broadcast %c0_i32 : i32 to vector<2x8xi32>
    %13 = arith.cmpi ne, %11, %12 : vector<2x8xi32>
    %cst_9 = arith.constant -1.000000e+30 : f32
    %14 = vector.broadcast %cst_9 : f32 to vector<2x8xf32>
    %15 = arith.select %13, %14, %10 : vector<2x8xi1>, vector<2x8xf32>
    %cst_10 = arith.constant dense<0xFF800000> : vector<2xf32>
    %16 = vector.multi_reduction <maximumf>, %15, %cst_10 [1] : vector<2x8xf32> to vector<2xf32>
    %17 = vector.shape_cast %16 : vector<2xf32> to vector<2x1xf32>
    %18 = vector.broadcast %17 : vector<2x1xf32> to vector<2x8xf32>
    %19 = arith.subf %15, %18 : vector<2x8xf32>
    %20 = math.exp %19 : vector<2x8xf32>
    %cst_11 = arith.constant dense<0.000000e+00> : vector<2xf32>
    %21 = vector.multi_reduction <add>, %20, %cst_11 [1] : vector<2x8xf32> to vector<2xf32>
    %22 = vector.shape_cast %21 : vector<2xf32> to vector<2x1xf32>
    %23 = tpu.reciprocal %22 {approx = true} : vector<2x1xf32> -> vector<2x1xf32>
    %24 = vector.broadcast %23 : vector<2x1xf32> to vector<2x8xf32>
    %25 = arith.mulf %20, %24 : vector<2x8xf32>
    %c0_12 = arith.constant 0 : index
    %c0_13 = arith.constant 0 : index
    %26 = vector.load %arg6[%c0_12, %c0_13] : memref<2x8xf32, #tpu.memory_space<vmem>>, vector<2x8xf32>
    tpu.vector_store %arg6[%c0_12, %c0_13], %25 {strides = array<i32>} : memref<2x8xf32, #tpu.memory_space<vmem>>, vector<2x8xf32>,
    %c0_14 = arith.constant 0 : index
    %c0_15 = arith.constant 0 : index
    %c0_16 = arith.constant 0 : index
    %27 = vector.load %arg2[%c0_14, %c0_15, %c0_16] : memref<2x8x24xf32, #tpu.memory_space<vmem>>, vector<2x8x24xf32>
    %28 = vector.shape_cast %25 : vector<2x8xf32> to vector<2x8x1xf32>
    %29 = vector.broadcast %28 : vector<2x8x1xf32> to vector<2x8x24xf32>
    %30 = arith.mulf %27, %29 : vector<2x8x24xf32>
    %cst_17 = arith.constant dense<0.000000e+00> : vector<2x24xf32>
    %31 = vector.multi_reduction <add>, %30, %cst_17 [1] : vector<2x8x24xf32> to vector<2x24xf32>
    %c0_18 = arith.constant 0 : index
    %c0_19 = arith.constant 0 : index
    %32 = vector.load %arg7[%c0_18, %c0_19] : memref<2x24xf32, #tpu.memory_space<vmem>>, vector<2x24xf32>
    tpu.vector_store %arg7[%c0_18, %c0_19], %31 {strides = array<i32>} : memref<2x24xf32, #tpu.memory_space<vmem>>, vector<2x24xf32>,
    return
  }
  func.func @transform_0(%arg0: i32) -> (i32, i32, i32) {
    %c0_i32 = arith.constant 0 : i32
    %c0_i32_0 = arith.constant 0 : i32
    %c0_i32_1 = arith.constant 0 : i32
    return %arg0, %c0_i32, %c0_i32_0 : i32, i32, i32
  }
  func.func @transform_1(%arg0: i32) -> (i32, i32, i32) {
    %c0_i32 = arith.constant 0 : i32
    %c0_i32_0 = arith.constant 0 : i32
    %c0_i32_1 = arith.constant 0 : i32
    return %arg0, %c0_i32, %c0_i32_0 : i32, i32, i32
  }
  func.func @transform_2(%arg0: i32) -> (i32, i32) {
    %c0_i32 = arith.constant 0 : i32
    %c0_i32_0 = arith.constant 0 : i32
    return %arg0, %c0_i32 : i32, i32
  }
  func.func @transform_3(%arg0: i32) -> (i32, i32) {
    %c0_i32 = arith.constant 0 : i32
    %c0_i32_0 = arith.constant 0 : i32
    %c0_i32_1 = arith.constant 0 : i32
    return %c0_i32, %c0_i32_0 : i32, i32
  }
  func.func @transform_4(%arg0: i32) -> (i32, i32) {
    %c0_i32 = arith.constant 0 : i32
    %c0_i32_0 = arith.constant 0 : i32
    %c0_i32_1 = arith.constant 0 : i32
    return %c0_i32, %c0_i32_0 : i32, i32
  }
  func.func @transform_5(%arg0: i32) -> (i32, i32) {
    %c0_i32 = arith.constant 0 : i32
    %c0_i32_0 = arith.constant 0 : i32
    return %arg0, %c0_i32 : i32, i32
  }
  func.func @transform_6(%arg0: i32) -> (i32, i32) {
    %c0_i32 = arith.constant 0 : i32
    %c0_i32_0 = arith.constant 0 : i32
    return %arg0, %c0_i32 : i32, i32
  }
}

</mosaic_0001>

<llo_original>
// kernel: tpu_custom_call.1
$region0: #{tpu_custom_call.1}
  #allocation0 [shape = 'u32[]', space=smem, size = 0x4, offset = 0x4, fixed_abs, tag = 'smem constant byte address 0x4 - core index']
  #allocation1 [shape = 'u32[144,128]{1,0:T(1,128)}', space=vmem, size = 0x12000, scoped, tag = 'internal scratch']
  %s0 = inlined_call_operand.vmem [shape: f32[2,8,40], index: 0, kind: input, shape index: {}]
  %s1 = inlined_call_operand.vmem [shape: f32[2,8,24], index: 1, kind: input, shape index: {}]
  %s2 = inlined_call_operand.vmem [shape: s32[2,8], index: 2, kind: input, shape index: {}]
  %s3 = inlined_call_operand.vmem [shape: f32[40,32], index: 3, kind: input, shape index: {}]
  %s4 = inlined_call_operand.vmem [shape: f32[1,32], index: 4, kind: input, shape index: {}]
  %s5 = inlined_call_operand.hbm [shape: f32[2,8], index: 5, kind: output, shape index: {0}]
  %s6 = inlined_call_operand.hbm [shape: f32[2,24], index: 6, kind: output, shape index: {1}]
  %7 = xla_tuple %s5, %s6
  %s8 = sld [smem:[#allocation0]]
  $region38: #{tpu_custom_call.1} parent=0
    _
  %s10 = ssub.s32 1, %s8
  %s11 = scalar_select 0, %s10, %s8
  $region1: #{tpu_custom_call.1} parent=0
    #allocation2 [shape = 'u8[1024]{0}', space=vmem, size = 0x400, scoped, tag = 'output window, operand 0, single buffered']
    #allocation3 [shape = 's32[1]{0}', space=sflag, size = 0x4, scoped, tag = 'scoped memory for tpu_custom_call.1']
    #allocation4 [shape = 'u8[1024]{0}', space=vmem, size = 0x400, scoped, tag = 'output window, operand 1, single buffered']
    #allocation5 [shape = 's32[1]{0}', space=sflag, size = 0x4, scoped, tag = 'scoped memory for tpu_custom_call.1']
    %12 = vsyncpa [#allocation3], 0
    %13 = vsyncpa [#allocation5], 0
    // Predicated region
    $region2: #{tpu_custom_call.1} parent=1 // pred_check
      _
    $region3: #{tpu_custom_call.1} parent=1 // pred_check_branch
      %15 = sbr.rel (0) target = $region5
    $region4: #{tpu_custom_call.1} parent=1 // pred_region
      _
    $region5: #{tpu_custom_call.1} parent=1 // pred_fallthru
      _
    // Predicated region
    $region6: #{tpu_custom_call.1} parent=1 // pred_check
      _
    $region7: #{tpu_custom_call.1} parent=1 // pred_check_branch
      %17 = sbr.rel (0) target = $region9
    $region8: #{tpu_custom_call.1} parent=1 // pred_region
      _
    $region9: #{tpu_custom_call.1} parent=1 // pred_fallthru
      _
    // Predicated region
    $region10: #{tpu_custom_call.1} parent=1 // pred_check
      _
    $region11: #{tpu_custom_call.1} parent=1 // pred_check_branch
      %19 = sbr.rel (0) target = $region13
    $region12: #{tpu_custom_call.1} parent=1 // pred_region
      _
    $region13: #{tpu_custom_call.1} parent=1 // pred_fallthru
      _
    // Predicated region
    $region14: #{tpu_custom_call.1} parent=1 // pred_check
      _
    $region15: #{tpu_custom_call.1} parent=1 // pred_check_branch
      %21 = sbr.rel (0) target = $region17
    $region16: #{tpu_custom_call.1} parent=1 // pred_region
      _
    $region17: #{tpu_custom_call.1} parent=1 // pred_fallthru
      _
    // Predicated region
    $region18: #{tpu_custom_call.1} parent=1 // pred_check
      _
    $region19: #{tpu_custom_call.1} parent=1 // pred_check_branch
      %23 = sbr.rel (0) target = $region21
    $region20: #{tpu_custom_call.1} parent=1 // pred_region
      _
    $region21: #{tpu_custom_call.1} parent=1 // pred_fallthru
      _
    %v24 = vld [vmem:[%s0] sm:$0xff]
    %v25 = vld [vmem:[%s0 + $0x8] sm:$0xff]
    %v26 = vld [vmem:[%s3] sm:$0xff]
    %v27 = vld [vmem:[%s3 + $0x8] sm:$0xff]
    %v28 = vld [vmem:[%s3 + $0x10] sm:$0xff]
    %v29 = vld [vmem:[%s3 + $0x18] sm:$0xff]
    %v30 = vld [vmem:[%s3 + $0x20] sm:$0xff]
    %vm31 = vcmask 326656
    %v33 = vsel %vm31, %v24, 0
    %v36 = vsel %vm31, %v25, 0
    %38 = vmatprep.subr.mxu0 0.0
    %39 = vmatpush1.msra.mxu0 %v26
    %40 = vmatprep.subr.mxu0 0.0
    %41 = vmatpush1.msra.mxu0 %v27
    %42 = vmatprep.subr.mxu0 0.0
    %43 = vmatpush1.msra.mxu0 %v28
    %44 = vmatprep.subr.mxu0 0.0
    %45 = vmatpush1.msra.mxu0 %v29
    %46 = vmatprep.subr.mxu0 0.0
    %47 = vmatpush1.msra.mxu0 %v30
    %48 = vmatprep.subr.mxu0 0.0
    %49 = vmatpush1.msra.mxu0 0.0
    %50 = vmatprep.subr.mxu0 0.0
    %51 = vmatpush1.msra.mxu0 0.0
    %52 = vmatprep.subr.mxu0 0.0
    %53 = vmatpush1.msra.mxu0 0.0
    %54 = vmatprep.subr.mxu0 0.0
    %55 = vmatpush1.msra.mxu0 0.0
    %56 = vmatprep.subr.mxu0 0.0
    %57 = vmatpush1.msra.mxu0 0.0
    %58 = vmatprep.subr.mxu0 0.0
    %59 = vmatpush1.msra.mxu0 0.0
    %60 = vmatprep.subr.mxu0 0.0
    %61 = vmatpush1.msra.mxu0 0.0
    %62 = vmatprep.subr.mxu0 0.0
    %63 = vmatpush1.msra.mxu0 0.0
    %64 = vmatprep.subr.mxu0 0.0
    %65 = vmatpush1.msra.mxu0 0.0
    %66 = vmatprep.subr.mxu0 0.0
    %67 = vmatpush1.msra.mxu0 0.0
    %68 = vmatprep.subr.mxu0 0.0
    %69 = vmatpush1.msra.mxu0 0.0
    %70 = vmatprep.subr.mxu0 0.0
    %71 = vmatpush1.msra.mxu0 0.0
    %72 = vmatprep.subr.mxu0 0.0
    %73 = vmatpush1.msra.mxu0 0.0
    %74 = vmatprep.subr.mxu0 0.0
    %75 = vmatpush1.msra.mxu0 0.0
    %76 = vmatprep.subr.mxu0 0.0
    %77 = vmatpush1.msra.mxu0 0.0
    %78 = vmatprep.subr.mxu0 0.0
    %79 = vmatpush1.msra.mxu0 0.0
    %80 = vmatprep.subr.mxu0 0.0
    %81 = vmatpush1.msra.mxu0 0.0
    %82 = vmatprep.subr.mxu0 0.0
    %83 = vmatpush1.msra.mxu0 0.0
    %84 = vmatprep.subr.mxu0 0.0
    %85 = vmatpush1.msra.mxu0 0.0
    %86 = vmatprep.subr.mxu0 0.0
    %87 = vmatpush1.msra.mxu0 0.0
    %88 = vmatprep.subr.mxu0 0.0
    %89 = vmatpush1.msra.mxu0 0.0
    %90 = vmatprep.subr.mxu0 0.0
    %91 = vmatpush1.msra.mxu0 0.0
    %92 = vmatprep.subr.mxu0 0.0
    %93 = vmatpush1.msra.mxu0 0.0
    %94 = vmatprep.subr.mxu0 0.0
    %95 = vmatpush1.msra.mxu0 0.0
    %96 = vmatprep.subr.mxu0 0.0
    %97 = vmatpush1.msra.mxu0 0.0
    %98 = vmatprep.subr.mxu0 0.0
    %99 = vmatpush1.msra.mxu0 0.0
    %100 = vmatprep.subr.mxu0 0.0
    %101 = vmatpush1.msra.mxu0 0.0
    %102 = vmatprep.mubr.f32.mxu0 0.0
    %103 = vmatmul.mubr.f32.gmra.mrb[0].mxu0 %v33
    %v104 = vpop.f32.mrb[0].mxu0
    %v105 = vadd.f32 0.0, %v104
    %v106 = vpop.f32.mrb[0].mxu0
    %107 = vmatprep.mubr.f32.mxu0 0.0
    %108 = vmatmul.mubr.f32.gmra.mrb[0].mxu0 %v36
    %v109 = vpop.f32.mrb[0].mxu0
    %v110 = vadd.f32 0.0, %v109
    %v111 = vpop.f32.mrb[0].mxu0
    %112 = vdwg.mxu0
    %v113 = vtanh.pop %v105
    %v114 = vtanh.pop %v110
    %v115 = vld [vmem:[%s4] sm:$0x1]
    %v117 = vlaneseq
    %v118 = vshrl.u32 %v117, 7
    %v119 = vsub.s32 0, %v118
    %v120 = vrot.slane %v115, %v119
    %v122 = vmul.f32 %v113, %v120
    %v123 = vmul.f32 %v114, %v120
    %vm124 = vcmask 261120
    %v125 = vsel %vm124, %v122, 0.0
    %126 = vadd.xlane.f32.xlu0 %v125
    %v127 = vpop.xlane.xlu0 %126
    %v128 = vsel %vm124, %v123, 0.0
    %129 = vadd.xlane.f32.xlu0 %v128
    %v130 = vpop.xlane.xlu0 %129
    %v131 = vld [vmem:[%s2] sm:$0x3]
    %vm132 = vcmp.ne.s32.totalorder %v131, 0
    %v135 = vlaneseq
    %v136 = vand.u32 %v135, 127
    %v137 = vlaneseq
    %v138 = vshrl.u32 %v137, 7
    %v139 = vsub.s32 %v136, %v138
    %v140 = vrot.slane %v127, %v139
    %v141 = vlaneseq
    %v142 = vshrl.u32 %v141, 7
    %v143 = vsub.s32 %v136, %v142
    %v144 = vrot.slane %v130, %v143
    %vm145 = vcmask 1041409
    %v146 = vsel %vm145, %v144, %v140
    %v148 = vsel %vm132, -1e+30, %v146
    %vm149 = vcmask 58368
    %v150 = vsel %vm149, %v148, -inf
    %151 = vmax.xlane.f32.xlu0 %v150
    %v152 = vpop.xlane.xlu0 %151
    %v153 = vsub.f32 %v148, %v152
    %v154 = vmul.f32 %v153, 1.442695
    %v155 = vpow.pop %v154
    %v156 = vsel %vm149, %v155, 0.0
    %157 = vadd.xlane.f32.xlu0 %v156
    %v158 = vpop.xlane.xlu0 %157
    %v159 = vrcp.pop %v158
    %v160 = vmul.f32 %v155, %v159
    %161 = vst.msk [vmem:[#allocation2] sm:$0x3] %vm149, %v160
    %v162 = vld [vmem:[%s1] sm:$0xff]
    %v163 = vld [vmem:[%s1 + $0x8] sm:$0xff]
    %v164 = vlaneseq
    %v165 = vshrl.u32 %v164, 7
    %v166 = vsub.s32 0, %v165
    %v167 = vrot.slane %v160, %v166
    %169 = vbcast.lane.b32.xlu0 %v167, 256
    %v170 = vpop.permute.xlu0 %169
    %v171 = vlaneseq
    %v172 = vshrl.u32 %v171, 7
    %v173 = vsub.s32 1, %v172
    %v174 = vrot.slane %v160, %v173
    %176 = vbcast.lane.b32.xlu0 %v174, 256
    %v177 = vpop.permute.xlu0 %176
    %v178 = vmul.f32 %v162, %v170
    %v179 = vmul.f32 %v163, %v177
    %vm180 = vcmask 195584
    %v181 = vsel %vm180, %v178, 0.0
    %v182 = vrot.slane %v181, 4
    %v183 = vadd.f32 %v181, %v182
    %v184 = vrot.slane %v183, 2
    %v185 = vadd.f32 %v183, %v184
    %v186 = vrot.slane %v185, 1
    %v187 = vadd.f32 %v185, %v186
    %v188 = vsel %vm180, %v179, 0.0
    %v189 = vrot.slane %v188, 4
    %v190 = vadd.f32 %v188, %v189
    %v191 = vrot.slane %v190, 2
    %v192 = vadd.f32 %v190, %v191
    %v193 = vrot.slane %v192, 1
    %v194 = vadd.f32 %v192, %v193
    %v197 = vsel %vm145, %v194, %v187
    %vm199 = vcmask 189440
    %200 = vst.msk [vmem:[#allocation4] sm:$0x3] %vm199, %v197
    // Predicated region
    $region22: #{tpu_custom_call.1} parent=1 // pred_check
      _
    $region23: #{tpu_custom_call.1} parent=1 // pred_check_branch
      %202 = sbr.rel (0) target = $region25
    $region24: #{tpu_custom_call.1} parent=1 // pred_region
      %s204 = ssub.s32 32, 32
      %205 = vsyncadd [#allocation3], %s204
      %s207 = sshll.u32 [#allocation2], 4
      %s208 = int_to_ptr.vmem [resolvable:$true] %s207
      %210 = dma.vmem_to_hbm [thread:$0]  %s208, 32, %s5, [#allocation3]
    $region25: #{tpu_custom_call.1} parent=1 // pred_fallthru
      _
    // Predicated region
    $region26: #{tpu_custom_call.1} parent=1 // pred_check
      _
    $region27: #{tpu_custom_call.1} parent=1 // pred_check_branch
      %212 = sbr.rel (0) target = $region29
    $region28: #{tpu_custom_call.1} parent=1 // pred_region
      %s214 = ssub.s32 32, 32
      %215 = vsyncadd [#allocation5], %s214
      %s217 = sshll.u32 [#allocation4], 4
      %s218 = int_to_ptr.vmem [resolvable:$true] %s217
      %220 = dma.vmem_to_hbm [thread:$0]  %s218, 32, %s6, [#allocation5]
    $region29: #{tpu_custom_call.1} parent=1 // pred_fallthru
      _
    // Predicated region
    $region30: #{tpu_custom_call.1} parent=1 // pred_check
      _
    $region31: #{tpu_custom_call.1} parent=1 // pred_check_branch
      %222 = sbr.rel (0) target = $region33
    $region32: #{tpu_custom_call.1} parent=1 // pred_region
      %223 = dma.done [#allocation3], 32
    $region33: #{tpu_custom_call.1} parent=1 // pred_fallthru
      _
    // Predicated region
    $region34: #{tpu_custom_call.1} parent=1 // pred_check
      _
    $region35: #{tpu_custom_call.1} parent=1 // pred_check_branch
      %225 = sbr.rel (0) target = $region37
    $region36: #{tpu_custom_call.1} parent=1 // pred_region
      %226 = dma.done [#allocation5], 32
    $region37: #{tpu_custom_call.1} parent=1 // pred_fallthru
      _
    %227 = vsyncpa [#allocation3], 1
    %228 = vsyncpa [#allocation5], 1

</llo_original>
